<compile_context>
chip_gen: v5e
topology: v5e:2x2
jax: 0.10.0
libtpu: 0.0.40
codegen_flags: <defaults>
</compile_context>

<pallas_src>
import jax
import jax.numpy as jnp
from jax.experimental import pallas as pl
from jax.experimental.pallas import tpu as pltpu

# ---- model sizes (mirroring Net(num_h) with the neurogym task's spaces) ----
OB_SIZE = 3      # env.observation_space.shape[0]
ACT_SIZE = 3     # env.action_space.n
NUM_H = 32       # num_h
SEQ_LEN = 8      # small seq for the demo
BATCH = 8        # fill the 8 f32 sublanes / MXU rows (near-free vs. B=2)


def lstm_linear_kernel(x_ref, w_ref, b_ref, wout_ref, bout_ref, y_ref, hs_ref):
    """Whole-sequence LSTM + output projection in one invocation.

    x_ref    : (T, B, I)      full input sequence (VMEM)
    w_ref    : (I+H, 4H)      [W_ih^T ; W_hh^T] fused gate weights
    b_ref    : (1, 4H)        b_ih + b_hh
    wout_ref : (H, A)         W_linear^T
    bout_ref : (1, A)         b_linear
    y_ref    : (T*B, A)       output, written once at the end
    hs_ref   : (T*B, H)       VMEM scratch accumulating h_t for the final matmul
    """
    T, B, _ = x_ref.shape
    H = wout_ref.shape[0]

    x_all = x_ref[...]           # (T, B, I)
    w = w_ref[...]               # (I+H, 4H)
    b = b_ref[...]               # (1, 4H)

    h = jnp.zeros((B, H), jnp.float32)
    c = jnp.zeros((B, H), jnp.float32)

    # T is a small compile-time constant -> static unroll; h/c stay in vregs.
    for t in range(T):
        xh = jnp.concatenate([x_all[t], h], axis=1)               # (B, I+H)
        gates = jnp.dot(xh, w, preferred_element_type=jnp.float32) + b  # (B, 4H)

        i_g = jax.nn.sigmoid(gates[:, 0 * H:1 * H])
        f_g = jax.nn.sigmoid(gates[:, 1 * H:2 * H])
        g_g = jnp.tanh(gates[:, 2 * H:3 * H])
        o_g = jax.nn.sigmoid(gates[:, 3 * H:4 * H])

        c = f_g * c + i_g * g_g
        h = o_g * jnp.tanh(c)

        hs_ref[pl.ds(t * B, B), :] = h          # static slice (t is a Python int)

    # Single output projection + single contiguous store (hoisted out of the
    # recurrence — it is not on the serial dependence chain).
    y = (jnp.dot(hs_ref[...], wout_ref[...], preferred_element_type=jnp.float32)
         + bout_ref[...])                        # (T*B, A)
    y_ref[...] = y.astype(y_ref.dtype)


def net_forward(x, params):
    """x: (T, B, OB_SIZE) float32 -> (T, B, ACT_SIZE) float32."""
    T, B, _ = x.shape
    w_fused, b, wout_t, bout = params
    H = wout_t.shape[0]
    A = wout_t.shape[1]

    y_flat = pl.pallas_call(
        lstm_linear_kernel,
        out_shape=jax.ShapeDtypeStruct((T * B, A), jnp.float32),
        in_specs=[pl.BlockSpec(memory_space=pltpu.MemorySpace.VMEM)] * 5,
        out_specs=pl.BlockSpec(memory_space=pltpu.MemorySpace.VMEM),
        scratch_shapes=[pltpu.VMEM((T * B, H), jnp.float32)],
    )(x, w_fused, b, wout_t, bout)

    return y_flat.reshape(T, B, A)   # free layout reshape outside the kernel


def init_params(key, ob_size, num_h, act_size):
    """Deterministic PyTorch-style uniform(-1/sqrt(H), 1/sqrt(H)) init."""
    ks = jax.random.split(key, 6)
    s = 1.0 / jnp.sqrt(jnp.float32(num_h))
    u = lambda k, shape: jax.random.uniform(k, shape, jnp.float32, -s, s)
    w_ih = u(ks[0], (4 * num_h, ob_size))   # PyTorch layout (4H, I), gate order i,f,g,o
    w_hh = u(ks[1], (4 * num_h, num_h))
    b_ih = u(ks[2], (4 * num_h,))
    b_hh = u(ks[3], (4 * num_h,))
    w_out = u(ks[4], (act_size, num_h))
    b_out = u(ks[5], (act_size,))

    # Kernel-side fusion: concat W_ih^T / W_hh^T, fuse the two biases.
    w_fused = jnp.concatenate([w_ih.T, w_hh.T], axis=0)      # (I+H, 4H)
    kernel_params = (w_fused, (b_ih + b_hh)[None, :], w_out.T, b_out[None, :])
    torch_params = (w_ih, w_hh, b_ih, b_hh, w_out, b_out)
    return kernel_params, torch_params


def reference_forward(x, torch_params):
    """Pure-JAX reference of nn.LSTM(1 layer) + nn.Linear for validation."""
    w_ih, w_hh, b_ih, b_hh, w_out, b_out = torch_params
    H = w_hh.shape[1]
    B = x.shape[1]

    def step(carry, x_t):
        h, c = carry
        g = x_t @ w_ih.T + b_ih + h @ w_hh.T + b_hh
        i = jax.nn.sigmoid(g[:, 0 * H:1 * H])
        f = jax.nn.sigmoid(g[:, 1 * H:2 * H])
        gg = jnp.tanh(g[:, 2 * H:3 * H])
        o = jax.nn.sigmoid(g[:, 3 * H:4 * H])
        c = f * c + i * gg
        h = o * jnp.tanh(c)
        return (h, c), h

    h0 = jnp.zeros((B, H), jnp.float32)
    (_, _), hs = jax.lax.scan(step, (h0, h0), x)
    return hs @ w_out.T + b_out


if __name__ == "__main__":
    key = jax.random.PRNGKey(0)
    k_x, k_p = jax.random.split(key)

    x = jax.random.normal(k_x, (SEQ_LEN, BATCH, OB_SIZE), dtype=jnp.float32)
    kernel_params, torch_params = init_params(k_p, OB_SIZE, NUM_H, ACT_SIZE)

    y = net_forward(x, kernel_params)
    y = jax.block_until_ready(y)

    y_ref = reference_forward(x, torch_params)
    assert y.shape == (SEQ_LEN, BATCH, ACT_SIZE)
    assert jnp.allclose(y, y_ref, atol=1e-5, rtol=1e-5)

    print("KERNEL_OK")
</pallas_src>

<mosaic_0001>
module attributes {stable_mosaic.version = 11 : i64} {
  func.func @lstm_linear_kernel(%arg0: memref<8x8x3xf32, #tpu.memory_space<vmem>>, %arg1: memref<35x128xf32, #tpu.memory_space<vmem>>, %arg2: memref<1x128xf32, #tpu.memory_space<vmem>>, %arg3: memref<32x3xf32, #tpu.memory_space<vmem>>, %arg4: memref<1x3xf32, #tpu.memory_space<vmem>>, %arg5: memref<64x3xf32, #tpu.memory_space<vmem>>, %arg6: memref<64x32xf32, #tpu.memory_space<vmem>>) attributes {dimension_semantics = [], scalar_prefetch = 0 : i64, scratch_operands = 1 : i64, tpu.core_type = #tpu.core_type<tc>} {
    %c0 = arith.constant 0 : index
    %c0_0 = arith.constant 0 : index
    %c0_1 = arith.constant 0 : index
    %0 = vector.load %arg0[%c0, %c0_0, %c0_1] : memref<8x8x3xf32, #tpu.memory_space<vmem>>, vector<8x8x3xf32>
    %c0_2 = arith.constant 0 : index
    %c0_3 = arith.constant 0 : index
    %1 = vector.load %arg1[%c0_2, %c0_3] : memref<35x128xf32, #tpu.memory_space<vmem>>, vector<35x128xf32>
    %c0_4 = arith.constant 0 : index
    %c0_5 = arith.constant 0 : index
    %2 = vector.load %arg2[%c0_4, %c0_5] : memref<1x128xf32, #tpu.memory_space<vmem>>, vector<1x128xf32>
    %cst = arith.constant 0.000000e+00 : f32
    %3 = vector.broadcast %cst : f32 to vector<8x32xf32>
    %cst_6 = arith.constant 0.000000e+00 : f32
    %4 = vector.broadcast %cst_6 : f32 to vector<8x32xf32>
    %5 = vector.extract_strided_slice %0 {offsets = [0, 0, 0], sizes = [1, 8, 3], strides = [1, 1, 1]} : vector<8x8x3xf32> to vector<1x8x3xf32>
    %6 = vector.shape_cast %5 : vector<1x8x3xf32> to vector<8x3xf32>
    %7 = tpu.concatenate %6, %3 in 1 : vector<8x3xf32>, vector<8x32xf32> -> vector<8x35xf32>
    %cst_7 = arith.constant dense<0.000000e+00> : vector<8x128xf32>
    %8 = tpu.matmul %7, %1, %cst_7 {dimension_numbers = #tpu.dot_dimension_numbers<[1], [0], [0], [1], [0, 0, 1, 1], [], []>} : vector<8x35xf32>, vector<35x128xf32>, vector<8x128xf32> -> vector<8x128xf32>
    %9 = vector.broadcast %2 : vector<1x128xf32> to vector<8x128xf32>
    %10 = arith.addf %8, %9 : vector<8x128xf32>
    %11 = vector.extract_strided_slice %10 {offsets = [0, 0], sizes = [8, 32], strides = [1, 1]} : vector<8x128xf32> to vector<8x32xf32>
    %12 = arith.negf %11 : vector<8x32xf32>
    %13 = math.exp %12 : vector<8x32xf32>
    %cst_8 = arith.constant 1.000000e+00 : f32
    %14 = vector.broadcast %cst_8 : f32 to vector<8x32xf32>
    %15 = arith.addf %14, %13 : vector<8x32xf32>
    %16 = arith.divf %14, %15 : vector<8x32xf32>
    %17 = vector.extract_strided_slice %10 {offsets = [0, 32], sizes = [8, 32], strides = [1, 1]} : vector<8x128xf32> to vector<8x32xf32>
    %18 = arith.negf %17 : vector<8x32xf32>
    %19 = math.exp %18 : vector<8x32xf32>
    %cst_9 = arith.constant 1.000000e+00 : f32
    %20 = vector.broadcast %cst_9 : f32 to vector<8x32xf32>
    %21 = arith.addf %20, %19 : vector<8x32xf32>
    %22 = arith.divf %20, %21 : vector<8x32xf32>
    %23 = vector.extract_strided_slice %10 {offsets = [0, 64], sizes = [8, 32], strides = [1, 1]} : vector<8x128xf32> to vector<8x32xf32>
    %24 = math.tanh %23 : vector<8x32xf32>
    %25 = vector.extract_strided_slice %10 {offsets = [0, 96], sizes = [8, 32], strides = [1, 1]} : vector<8x128xf32> to vector<8x32xf32>
    %26 = arith.negf %25 : vector<8x32xf32>
    %27 = math.exp %26 : vector<8x32xf32>
    %cst_10 = arith.constant 1.000000e+00 : f32
    %28 = vector.broadcast %cst_10 : f32 to vector<8x32xf32>
    %29 = arith.addf %28, %27 : vector<8x32xf32>
    %30 = arith.divf %28, %29 : vector<8x32xf32>
    %31 = arith.mulf %22, %4 : vector<8x32xf32>
    %32 = arith.mulf %16, %24 : vector<8x32xf32>
    %33 = arith.addf %31, %32 : vector<8x32xf32>
    %34 = math.tanh %33 : vector<8x32xf32>
    %35 = arith.mulf %30, %34 : vector<8x32xf32>
    %c0_11 = arith.constant 0 : index
    %c0_12 = arith.constant 0 : index
    %36 = vector.load %arg6[%c0_11, %c0_12] : memref<64x32xf32, #tpu.memory_space<vmem>>, vector<8x32xf32>
    tpu.vector_store %arg6[%c0_11, %c0_12], %35 {strides = array<i32>} : memref<64x32xf32, #tpu.memory_space<vmem>>, vector<8x32xf32>,
    %37 = vector.extract_strided_slice %0 {offsets = [1, 0, 0], sizes = [1, 8, 3], strides = [1, 1, 1]} : vector<8x8x3xf32> to vector<1x8x3xf32>
    %38 = vector.shape_cast %37 : vector<1x8x3xf32> to vector<8x3xf32>
    %39 = tpu.concatenate %38, %35 in 1 : vector<8x3xf32>, vector<8x32xf32> -> vector<8x35xf32>
    %cst_13 = arith.constant dense<0.000000e+00> : vector<8x128xf32>
    %40 = tpu.matmul %39, %1, %cst_13 {dimension_numbers = #tpu.dot_dimension_numbers<[1], [0], [0], [1], [0, 0, 1, 1], [], []>} : vector<8x35xf32>, vector<35x128xf32>, vector<8x128xf32> -> vector<8x128xf32>
    %41 = vector.broadcast %2 : vector<1x128xf32> to vector<8x128xf32>
    %42 = arith.addf %40, %41 : vector<8x128xf32>
    %43 = vector.extract_strided_slice %42 {offsets = [0, 0], sizes = [8, 32], strides = [1, 1]} : vector<8x128xf32> to vector<8x32xf32>
    %44 = arith.negf %43 : vector<8x32xf32>
    %45 = math.exp %44 : vector<8x32xf32>
    %cst_14 = arith.constant 1.000000e+00 : f32
    %46 = vector.broadcast %cst_14 : f32 to vector<8x32xf32>
    %47 = arith.addf %46, %45 : vector<8x32xf32>
    %48 = arith.divf %46, %47 : vector<8x32xf32>
    %49 = vector.extract_strided_slice %42 {offsets = [0, 32], sizes = [8, 32], strides = [1, 1]} : vector<8x128xf32> to vector<8x32xf32>
    %50 = arith.negf %49 : vector<8x32xf32>
    %51 = math.exp %50 : vector<8x32xf32>
    %cst_15 = arith.constant 1.000000e+00 : f32
    %52 = vector.broadcast %cst_15 : f32 to vector<8x32xf32>
    %53 = arith.addf %52, %51 : vector<8x32xf32>
    %54 = arith.divf %52, %53 : vector<8x32xf32>
    %55 = vector.extract_strided_slice %42 {offsets = [0, 64], sizes = [8, 32], strides = [1, 1]} : vector<8x128xf32> to vector<8x32xf32>
    %56 = math.tanh %55 : vector<8x32xf32>
    %57 = vector.extract_strided_slice %42 {offsets = [0, 96], sizes = [8, 32], strides = [1, 1]} : vector<8x128xf32> to vector<8x32xf32>
    %58 = arith.negf %57 : vector<8x32xf32>
    %59 = math.exp %58 : vector<8x32xf32>
    %cst_16 = arith.constant 1.000000e+00 : f32
    %60 = vector.broadcast %cst_16 : f32 to vector<8x32xf32>
    %61 = arith.addf %60, %59 : vector<8x32xf32>
    %62 = arith.divf %60, %61 : vector<8x32xf32>
    %63 = arith.mulf %54, %33 : vector<8x32xf32>
    %64 = arith.mulf %48, %56 : vector<8x32xf32>
    %65 = arith.addf %63, %64 : vector<8x32xf32>
    %66 = math.tanh %65 : vector<8x32xf32>
    %67 = arith.mulf %62, %66 : vector<8x32xf32>
    %c8 = arith.constant 8 : index
    %c0_17 = arith.constant 0 : index
    %68 = vector.load %arg6[%c8, %c0_17] : memref<64x32xf32, #tpu.memory_space<vmem>>, vector<8x32xf32>
    tpu.vector_store %arg6[%c8, %c0_17], %67 {strides = array<i32>} : memref<64x32xf32, #tpu.memory_space<vmem>>, vector<8x32xf32>,
    %69 = vector.extract_strided_slice %0 {offsets = [2, 0, 0], sizes = [1, 8, 3], strides = [1, 1, 1]} : vector<8x8x3xf32> to vector<1x8x3xf32>
    %70 = vector.shape_cast %69 : vector<1x8x3xf32> to vector<8x3xf32>
    %71 = tpu.concatenate %70, %67 in 1 : vector<8x3xf32>, vector<8x32xf32> -> vector<8x35xf32>
    %cst_18 = arith.constant dense<0.000000e+00> : vector<8x128xf32>
    %72 = tpu.matmul %71, %1, %cst_18 {dimension_numbers = #tpu.dot_dimension_numbers<[1], [0], [0], [1], [0, 0, 1, 1], [], []>} : vector<8x35xf32>, vector<35x128xf32>, vector<8x128xf32> -> vector<8x128xf32>
    %73 = vector.broadcast %2 : vector<1x128xf32> to vector<8x128xf32>
    %74 = arith.addf %72, %73 : vector<8x128xf32>
    %75 = vector.extract_strided_slice %74 {offsets = [0, 0], sizes = [8, 32], strides = [1, 1]} : vector<8x128xf32> to vector<8x32xf32>
    %76 = arith.negf %75 : vector<8x32xf32>
    %77 = math.exp %76 : vector<8x32xf32>
    %cst_19 = arith.constant 1.000000e+00 : f32
    %78 = vector.broadcast %cst_19 : f32 to vector<8x32xf32>
    %79 = arith.addf %78, %77 : vector<8x32xf32>
    %80 = arith.divf %78, %79 : vector<8x32xf32>
    %81 = vector.extract_strided_slice %74 {offsets = [0, 32], sizes = [8, 32], strides = [1, 1]} : vector<8x128xf32> to vector<8x32xf32>
    %82 = arith.negf %81 : vector<8x32xf32>
    %83 = math.exp %82 : vector<8x32xf32>
    %cst_20 = arith.constant 1.000000e+00 : f32
    %84 = vector.broadcast %cst_20 : f32 to vector<8x32xf32>
    %85 = arith.addf %84, %83 : vector<8x32xf32>
    %86 = arith.divf %84, %85 : vector<8x32xf32>
    %87 = vector.extract_strided_slice %74 {offsets = [0, 64], sizes = [8, 32], strides = [1, 1]} : vector<8x128xf32> to vector<8x32xf32>
    %88 = math.tanh %87 : vector<8x32xf32>
    %89 = vector.extract_strided_slice %74 {offsets = [0, 96], sizes = [8, 32], strides = [1, 1]} : vector<8x128xf32> to vector<8x32xf32>
    %90 = arith.negf %89 : vector<8x32xf32>
    %91 = math.exp %90 : vector<8x32xf32>
    %cst_21 = arith.constant 1.000000e+00 : f32
    %92 = vector.broadcast %cst_21 : f32 to vector<8x32xf32>
    %93 = arith.addf %92, %91 : vector<8x32xf32>
    %94 = arith.divf %92, %93 : vector<8x32xf32>
    %95 = arith.mulf %86, %65 : vector<8x32xf32>
    %96 = arith.mulf %80, %88 : vector<8x32xf32>
    %97 = arith.addf %95, %96 : vector<8x32xf32>
    %98 = math.tanh %97 : vector<8x32xf32>
    %99 = arith.mulf %94, %98 : vector<8x32xf32>
    %c16 = arith.constant 16 : index
    %c0_22 = arith.constant 0 : index
    %100 = vector.load %arg6[%c16, %c0_22] : memref<64x32xf32, #tpu.memory_space<vmem>>, vector<8x32xf32>
    tpu.vector_store %arg6[%c16, %c0_22], %99 {strides = array<i32>} : memref<64x32xf32, #tpu.memory_space<vmem>>, vector<8x32xf32>,
    %101 = vector.extract_strided_slice %0 {offsets = [3, 0, 0], sizes = [1, 8, 3], strides = [1, 1, 1]} : vector<8x8x3xf32> to vector<1x8x3xf32>
    %102 = vector.shape_cast %101 : vector<1x8x3xf32> to vector<8x3xf32>
    %103 = tpu.concatenate %102, %99 in 1 : vector<8x3xf32>, vector<8x32xf32> -> vector<8x35xf32>
    %cst_23 = arith.constant dense<0.000000e+00> : vector<8x128xf32>
    %104 = tpu.matmul %103, %1, %cst_23 {dimension_numbers = #tpu.dot_dimension_numbers<[1], [0], [0], [1], [0, 0, 1, 1], [], []>} : vector<8x35xf32>, vector<35x128xf32>, vector<8x128xf32> -> vector<8x128xf32>
    %105 = vector.broadcast %2 : vector<1x128xf32> to vector<8x128xf32>
    %106 = arith.addf %104, %105 : vector<8x128xf32>
    %107 = vector.extract_strided_slice %106 {offsets = [0, 0], sizes = [8, 32], strides = [1, 1]} : vector<8x128xf32> to vector<8x32xf32>
    %108 = arith.negf %107 : vector<8x32xf32>
    %109 = math.exp %108 : vector<8x32xf32>
    %cst_24 = arith.constant 1.000000e+00 : f32
    %110 = vector.broadcast %cst_24 : f32 to vector<8x32xf32>
    %111 = arith.addf %110, %109 : vector<8x32xf32>
    %112 = arith.divf %110, %111 : vector<8x32xf32>
    %113 = vector.extract_strided_slice %106 {offsets = [0, 32], sizes = [8, 32], strides = [1, 1]} : vector<8x128xf32> to vector<8x32xf32>
    %114 = arith.negf %113 : vector<8x32xf32>
    %115 = math.exp %114 : vector<8x32xf32>
    %cst_25 = arith.constant 1.000000e+00 : f32
    %116 = vector.broadcast %cst_25 : f32 to vector<8x32xf32>
    %117 = arith.addf %116, %115 : vector<8x32xf32>
    %118 = arith.divf %116, %117 : vector<8x32xf32>
    %119 = vector.extract_strided_slice %106 {offsets = [0, 64], sizes = [8, 32], strides = [1, 1]} : vector<8x128xf32> to vector<8x32xf32>
    %120 = math.tanh %119 : vector<8x32xf32>
    %121 = vector.extract_strided_slice %106 {offsets = [0, 96], sizes = [8, 32], strides = [1, 1]} : vector<8x128xf32> to vector<8x32xf32>
    %122 = arith.negf %121 : vector<8x32xf32>
    %123 = math.exp %122 : vector<8x32xf32>
    %cst_26 = arith.constant 1.000000e+00 : f32
    %124 = vector.broadcast %cst_26 : f32 to vector<8x32xf32>
    %125 = arith.addf %124, %123 : vector<8x32xf32>
    %126 = arith.divf %124, %125 : vector<8x32xf32>
    %127 = arith.mulf %118, %97 : vector<8x32xf32>
    %128 = arith.mulf %112, %120 : vector<8x32xf32>
    %129 = arith.addf %127, %128 : vector<8x32xf32>
    %130 = math.tanh %129 : vector<8x32xf32>
    %131 = arith.mulf %126, %130 : vector<8x32xf32>
    %c24 = arith.constant 24 : index
    %c0_27 = arith.constant 0 : index
    %132 = vector.load %arg6[%c24, %c0_27] : memref<64x32xf32, #tpu.memory_space<vmem>>, vector<8x32xf32>
    tpu.vector_store %arg6[%c24, %c0_27], %131 {strides = array<i32>} : memref<64x32xf32, #tpu.memory_space<vmem>>, vector<8x32xf32>,
    %133 = vector.extract_strided_slice %0 {offsets = [4, 0, 0], sizes = [1, 8, 3], strides = [1, 1, 1]} : vector<8x8x3xf32> to vector<1x8x3xf32>
    %134 = vector.shape_cast %133 : vector<1x8x3xf32> to vector<8x3xf32>
    %135 = tpu.concatenate %134, %131 in 1 : vector<8x3xf32>, vector<8x32xf32> -> vector<8x35xf32>
    %cst_28 = arith.constant dense<0.000000e+00> : vector<8x128xf32>
    %136 = tpu.matmul %135, %1, %cst_28 {dimension_numbers = #tpu.dot_dimension_numbers<[1], [0], [0], [1], [0, 0, 1, 1], [], []>} : vector<8x35xf32>, vector<35x128xf32>, vector<8x128xf32> -> vector<8x128xf32>
    %137 = vector.broadcast %2 : vector<1x128xf32> to vector<8x128xf32>
    %138 = arith.addf %136, %137 : vector<8x128xf32>
    %139 = vector.extract_strided_slice %138 {offsets = [0, 0], sizes = [8, 32], strides = [1, 1]} : vector<8x128xf32> to vector<8x32xf32>
    %140 = arith.negf %139 : vector<8x32xf32>
    %141 = math.exp %140 : vector<8x32xf32>
    %cst_29 = arith.constant 1.000000e+00 : f32
    %142 = vector.broadcast %cst_29 : f32 to vector<8x32xf32>
    %143 = arith.addf %142, %141 : vector<8x32xf32>
    %144 = arith.divf %142, %143 : vector<8x32xf32>
    %145 = vector.extract_strided_slice %138 {offsets = [0, 32], sizes = [8, 32], strides = [1, 1]} : vector<8x128xf32> to vector<8x32xf32>
    %146 = arith.negf %145 : vector<8x32xf32>
    %147 = math.exp %146 : vector<8x32xf32>
    %cst_30 = arith.constant 1.000000e+00 : f32
    %148 = vector.broadcast %cst_30 : f32 to vector<8x32xf32>
    %149 = arith.addf %148, %147 : vector<8x32xf32>
    %150 = arith.divf %148, %149 : vector<8x32xf32>
    %151 = vector.extract_strided_slice %138 {offsets = [0, 64], sizes = [8, 32], strides = [1, 1]} : vector<8x128xf32> to vector<8x32xf32>
    %152 = math.tanh %151 : vector<8x32xf32>
    %153 = vector.extract_strided_slice %138 {offsets = [0, 96], sizes = [8, 32], strides = [1, 1]} : vector<8x128xf32> to vector<8x32xf32>
    %154 = arith.negf %153 : vector<8x32xf32>
    %155 = math.exp %154 : vector<8x32xf32>
    %cst_31 = arith.constant 1.000000e+00 : f32
    %156 = vector.broadcast %cst_31 : f32 to vector<8x32xf32>
    %157 = arith.addf %156, %155 : vector<8x32xf32>
    %158 = arith.divf %156, %157 : vector<8x32xf32>
    %159 = arith.mulf %150, %129 : vector<8x32xf32>
    %160 = arith.mulf %144, %152 : vector<8x32xf32>
    %161 = arith.addf %159, %160 : vector<8x32xf32>
    %162 = math.tanh %161 : vector<8x32xf32>
    %163 = arith.mulf %158, %162 : vector<8x32xf32>
    %c32 = arith.constant 32 : index
    %c0_32 = arith.constant 0 : index
    %164 = vector.load %arg6[%c32, %c0_32] : memref<64x32xf32, #tpu.memory_space<vmem>>, vector<8x32xf32>
    tpu.vector_store %arg6[%c32, %c0_32], %163 {strides = array<i32>} : memref<64x32xf32, #tpu.memory_space<vmem>>, vector<8x32xf32>,
    %165 = vector.extract_strided_slice %0 {offsets = [5, 0, 0], sizes = [1, 8, 3], strides = [1, 1, 1]} : vector<8x8x3xf32> to vector<1x8x3xf32>
    %166 = vector.shape_cast %165 : vector<1x8x3xf32> to vector<8x3xf32>
    %167 = tpu.concatenate %166, %163 in 1 : vector<8x3xf32>, vector<8x32xf32> -> vector<8x35xf32>
    %cst_33 = arith.constant dense<0.000000e+00> : vector<8x128xf32>
    %168 = tpu.matmul %167, %1, %cst_33 {dimension_numbers = #tpu.dot_dimension_numbers<[1], [0], [0], [1], [0, 0, 1, 1], [], []>} : vector<8x35xf32>, vector<35x128xf32>, vector<8x128xf32> -> vector<8x128xf32>
    %169 = vector.broadcast %2 : vector<1x128xf32> to vector<8x128xf32>
    %170 = arith.addf %168, %169 : vector<8x128xf32>
    %171 = vector.extract_strided_slice %170 {offsets = [0, 0], sizes = [8, 32], strides = [1, 1]} : vector<8x128xf32> to vector<8x32xf32>
    %172 = arith.negf %171 : vector<8x32xf32>
    %173 = math.exp %172 : vector<8x32xf32>
    %cst_34 = arith.constant 1.000000e+00 : f32
    %174 = vector.broadcast %cst_34 : f32 to vector<8x32xf32>
    %175 = arith.addf %174, %173 : vector<8x32xf32>
    %176 = arith.divf %174, %175 : vector<8x32xf32>
    %177 = vector.extract_strided_slice %170 {offsets = [0, 32], sizes = [8, 32], strides = [1, 1]} : vector<8x128xf32> to vector<8x32xf32>
    %178 = arith.negf %177 : vector<8x32xf32>
    %179 = math.exp %178 : vector<8x32xf32>
    %cst_35 = arith.constant 1.000000e+00 : f32
    %180 = vector.broadcast %cst_35 : f32 to vector<8x32xf32>
    %181 = arith.addf %180, %179 : vector<8x32xf32>
    %182 = arith.divf %180, %181 : vector<8x32xf32>
    %183 = vector.extract_strided_slice %170 {offsets = [0, 64], sizes = [8, 32], strides = [1, 1]} : vector<8x128xf32> to vector<8x32xf32>
    %184 = math.tanh %183 : vector<8x32xf32>
    %185 = vector.extract_strided_slice %170 {offsets = [0, 96], sizes = [8, 32], strides = [1, 1]} : vector<8x128xf32> to vector<8x32xf32>
    %186 = arith.negf %185 : vector<8x32xf32>
    %187 = math.exp %186 : vector<8x32xf32>
    %cst_36 = arith.constant 1.000000e+00 : f32
    %188 = vector.broadcast %cst_36 : f32 to vector<8x32xf32>
    %189 = arith.addf %188, %187 : vector<8x32xf32>
    %190 = arith.divf %188, %189 : vector<8x32xf32>
    %191 = arith.mulf %182, %161 : vector<8x32xf32>
    %192 = arith.mulf %176, %184 : vector<8x32xf32>
    %193 = arith.addf %191, %192 : vector<8x32xf32>
    %194 = math.tanh %193 : vector<8x32xf32>
    %195 = arith.mulf %190, %194 : vector<8x32xf32>
    %c40 = arith.constant 40 : index
    %c0_37 = arith.constant 0 : index
    %196 = vector.load %arg6[%c40, %c0_37] : memref<64x32xf32, #tpu.memory_space<vmem>>, vector<8x32xf32>
    tpu.vector_store %arg6[%c40, %c0_37], %195 {strides = array<i32>} : memref<64x32xf32, #tpu.memory_space<vmem>>, vector<8x32xf32>,
    %197 = vector.extract_strided_slice %0 {offsets = [6, 0, 0], sizes = [1, 8, 3], strides = [1, 1, 1]} : vector<8x8x3xf32> to vector<1x8x3xf32>
    %198 = vector.shape_cast %197 : vector<1x8x3xf32> to vector<8x3xf32>
    %199 = tpu.concatenate %198, %195 in 1 : vector<8x3xf32>, vector<8x32xf32> -> vector<8x35xf32>
    %cst_38 = arith.constant dense<0.000000e+00> : vector<8x128xf32>
    %200 = tpu.matmul %199, %1, %cst_38 {dimension_numbers = #tpu.dot_dimension_numbers<[1], [0], [0], [1], [0, 0, 1, 1], [], []>} : vector<8x35xf32>, vector<35x128xf32>, vector<8x128xf32> -> vector<8x128xf32>
    %201 = vector.broadcast %2 : vector<1x128xf32> to vector<8x128xf32>
    %202 = arith.addf %200, %201 : vector<8x128xf32>
    %203 = vector.extract_strided_slice %202 {offsets = [0, 0], sizes = [8, 32], strides = [1, 1]} : vector<8x128xf32> to vector<8x32xf32>
    %204 = arith.negf %203 : vector<8x32xf32>
    %205 = math.exp %204 : vector<8x32xf32>
    %cst_39 = arith.constant 1.000000e+00 : f32
    %206 = vector.broadcast %cst_39 : f32 to vector<8x32xf32>
    %207 = arith.addf %206, %205 : vector<8x32xf32>
    %208 = arith.divf %206, %207 : vector<8x32xf32>
    %209 = vector.extract_strided_slice %202 {offsets = [0, 32], sizes = [8, 32], strides = [1, 1]} : vector<8x128xf32> to vector<8x32xf32>
    %210 = arith.negf %209 : vector<8x32xf32>
    %211 = math.exp %210 : vector<8x32xf32>
    %cst_40 = arith.constant 1.000000e+00 : f32
    %212 = vector.broadcast %cst_40 : f32 to vector<8x32xf32>
    %213 = arith.addf %212, %211 : vector<8x32xf32>
    %214 = arith.divf %212, %213 : vector<8x32xf32>
    %215 = vector.extract_strided_slice %202 {offsets = [0, 64], sizes = [8, 32], strides = [1, 1]} : vector<8x128xf32> to vector<8x32xf32>
    %216 = math.tanh %215 : vector<8x32xf32>
    %217 = vector.extract_strided_slice %202 {offsets = [0, 96], sizes = [8, 32], strides = [1, 1]} : vector<8x128xf32> to vector<8x32xf32>
    %218 = arith.negf %217 : vector<8x32xf32>
    %219 = math.exp %218 : vector<8x32xf32>
    %cst_41 = arith.constant 1.000000e+00 : f32
    %220 = vector.broadcast %cst_41 : f32 to vector<8x32xf32>
    %221 = arith.addf %220, %219 : vector<8x32xf32>
    %222 = arith.divf %220, %221 : vector<8x32xf32>
    %223 = arith.mulf %214, %193 : vector<8x32xf32>
    %224 = arith.mulf %208, %216 : vector<8x32xf32>
    %225 = arith.addf %223, %224 : vector<8x32xf32>
    %226 = math.tanh %225 : vector<8x32xf32>
    %227 = arith.mulf %222, %226 : vector<8x32xf32>
    %c48 = arith.constant 48 : index
    %c0_42 = arith.constant 0 : index
    %228 = vector.load %arg6[%c48, %c0_42] : memref<64x32xf32, #tpu.memory_space<vmem>>, vector<8x32xf32>
    tpu.vector_store %arg6[%c48, %c0_42], %227 {strides = array<i32>} : memref<64x32xf32, #tpu.memory_space<vmem>>, vector<8x32xf32>,
    %229 = vector.extract_strided_slice %0 {offsets = [7, 0, 0], sizes = [1, 8, 3], strides = [1, 1, 1]} : vector<8x8x3xf32> to vector<1x8x3xf32>
    %230 = vector.shape_cast %229 : vector<1x8x3xf32> to vector<8x3xf32>
    %231 = tpu.concatenate %230, %227 in 1 : vector<8x3xf32>, vector<8x32xf32> -> vector<8x35xf32>
    %cst_43 = arith.constant dense<0.000000e+00> : vector<8x128xf32>
    %232 = tpu.matmul %231, %1, %cst_43 {dimension_numbers = #tpu.dot_dimension_numbers<[1], [0], [0], [1], [0, 0, 1, 1], [], []>} : vector<8x35xf32>, vector<35x128xf32>, vector<8x128xf32> -> vector<8x128xf32>
    %233 = vector.broadcast %2 : vector<1x128xf32> to vector<8x128xf32>
    %234 = arith.addf %232, %233 : vector<8x128xf32>
    %235 = vector.extract_strided_slice %234 {offsets = [0, 0], sizes = [8, 32], strides = [1, 1]} : vector<8x128xf32> to vector<8x32xf32>
    %236 = arith.negf %235 : vector<8x32xf32>
    %237 = math.exp %236 : vector<8x32xf32>
    %cst_44 = arith.constant 1.000000e+00 : f32
    %238 = vector.broadcast %cst_44 : f32 to vector<8x32xf32>
    %239 = arith.addf %238, %237 : vector<8x32xf32>
    %240 = arith.divf %238, %239 : vector<8x32xf32>
    %241 = vector.extract_strided_slice %234 {offsets = [0, 32], sizes = [8, 32], strides = [1, 1]} : vector<8x128xf32> to vector<8x32xf32>
    %242 = arith.negf %241 : vector<8x32xf32>
    %243 = math.exp %242 : vector<8x32xf32>
    %cst_45 = arith.constant 1.000000e+00 : f32
    %244 = vector.broadcast %cst_45 : f32 to vector<8x32xf32>
    %245 = arith.addf %244, %243 : vector<8x32xf32>
    %246 = arith.divf %244, %245 : vector<8x32xf32>
    %247 = vector.extract_strided_slice %234 {offsets = [0, 64], sizes = [8, 32], strides = [1, 1]} : vector<8x128xf32> to vector<8x32xf32>
    %248 = math.tanh %247 : vector<8x32xf32>
    %249 = vector.extract_strided_slice %234 {offsets = [0, 96], sizes = [8, 32], strides = [1, 1]} : vector<8x128xf32> to vector<8x32xf32>
    %250 = arith.negf %249 : vector<8x32xf32>
    %251 = math.exp %250 : vector<8x32xf32>
    %cst_46 = arith.constant 1.000000e+00 : f32
    %252 = vector.broadcast %cst_46 : f32 to vector<8x32xf32>
    %253 = arith.addf %252, %251 : vector<8x32xf32>
    %254 = arith.divf %252, %253 : vector<8x32xf32>
    %255 = arith.mulf %246, %225 : vector<8x32xf32>
    %256 = arith.mulf %240, %248 : vector<8x32xf32>
    %257 = arith.addf %255, %256 : vector<8x32xf32>
    %258 = math.tanh %257 : vector<8x32xf32>
    %259 = arith.mulf %254, %258 : vector<8x32xf32>
    %c56 = arith.constant 56 : index
    %c0_47 = arith.constant 0 : index
    %260 = vector.load %arg6[%c56, %c0_47] : memref<64x32xf32, #tpu.memory_space<vmem>>, vector<8x32xf32>
    tpu.vector_store %arg6[%c56, %c0_47], %259 {strides = array<i32>} : memref<64x32xf32, #tpu.memory_space<vmem>>, vector<8x32xf32>,
    %c0_48 = arith.constant 0 : index
    %c0_49 = arith.constant 0 : index
    %261 = vector.load %arg6[%c0_48, %c0_49] : memref<64x32xf32, #tpu.memory_space<vmem>>, vector<64x32xf32>
    %c0_50 = arith.constant 0 : index
    %c0_51 = arith.constant 0 : index
    %262 = vector.load %arg3[%c0_50, %c0_51] : memref<32x3xf32, #tpu.memory_space<vmem>>, vector<32x3xf32>
    %cst_52 = arith.constant dense<0.000000e+00> : vector<64x3xf32>
    %263 = tpu.matmul %261, %262, %cst_52 {dimension_numbers = #tpu.dot_dimension_numbers<[1], [0], [0], [1], [0, 0, 1, 1], [], []>} : vector<64x32xf32>, vector<32x3xf32>, vector<64x3xf32> -> vector<64x3xf32>
    %c0_53 = arith.constant 0 : index
    %c0_54 = arith.constant 0 : index
    %264 = vector.load %arg4[%c0_53, %c0_54] : memref<1x3xf32, #tpu.memory_space<vmem>>, vector<1x3xf32>
    %265 = vector.broadcast %264 : vector<1x3xf32> to vector<64x3xf32>
    %266 = arith.addf %263, %265 : vector<64x3xf32>
    %c0_55 = arith.constant 0 : index
    %c0_56 = arith.constant 0 : index
    %267 = vector.load %arg5[%c0_55, %c0_56] : memref<64x3xf32, #tpu.memory_space<vmem>>, vector<64x3xf32>
    tpu.vector_store %arg5[%c0_55, %c0_56], %266 {strides = array<i32>} : memref<64x3xf32, #tpu.memory_space<vmem>>, vector<64x3xf32>,
    return
  }
}

</mosaic_0001>

<llo_original>
// kernel: tpu_custom_call.1
$region0: #{tpu_custom_call.1}
  #allocation0 [shape = 'u32[]', space=smem, size = 0x4, offset = 0x4, fixed_abs, tag = 'smem constant byte address 0x4 - core index']
  #allocation1 [shape = 'u32[72,128]{1,0:T(1,128)}', space=vmem, size = 0x9000, scoped, tag = 'internal scratch']
  #allocation2 [shape = 'f32[64,32]{1,0:T(8,128)}', space=vmem, size = 0x8000, scoped, tag = 'scratch operand']
  %s0 = inlined_call_operand.vmem [shape: f32[8,8,3], index: 0, kind: input, shape index: {}]
  %s1 = inlined_call_operand.vmem [shape: f32[35,128], index: 1, kind: input, shape index: {}]
  %s2 = inlined_call_operand.vmem [shape: f32[1,128], index: 2, kind: input, shape index: {}]
  %s3 = inlined_call_operand.vmem [shape: f32[32,3], index: 3, kind: input, shape index: {}]
  %s4 = inlined_call_operand.vmem [shape: f32[1,3], index: 4, kind: input, shape index: {}]
  %s5 = inlined_call_operand.vmem [shape: f32[64,3], index: 5, kind: output, shape index: {}]
  %s6 = sld [smem:[#allocation0]]
  $region30: #{tpu_custom_call.1} parent=0
    _
  %s8 = ssub.s32 1, %s6
  %s9 = scalar_select 0, %s8, %s6
  // Predicated region
  $region2: #{tpu_custom_call.1} parent=0 // pred_check
    _
  $region3: #{tpu_custom_call.1} parent=0 // pred_check_branch
    %11 = sbr.rel (0) target = $region5
  $region4: #{tpu_custom_call.1} parent=0 // pred_region
    _
  $region5: #{tpu_custom_call.1} parent=0 // pred_fallthru
    _
  // Predicated region
  $region6: #{tpu_custom_call.1} parent=0 // pred_check
    _
  $region7: #{tpu_custom_call.1} parent=0 // pred_check_branch
    %13 = sbr.rel (0) target = $region9
  $region8: #{tpu_custom_call.1} parent=0 // pred_region
    _
  $region9: #{tpu_custom_call.1} parent=0 // pred_fallthru
    _
  // Predicated region
  $region10: #{tpu_custom_call.1} parent=0 // pred_check
    _
  $region11: #{tpu_custom_call.1} parent=0 // pred_check_branch
    %15 = sbr.rel (0) target = $region13
  $region12: #{tpu_custom_call.1} parent=0 // pred_region
    _
  $region13: #{tpu_custom_call.1} parent=0 // pred_fallthru
    _
  // Predicated region
  $region14: #{tpu_custom_call.1} parent=0 // pred_check
    _
  $region15: #{tpu_custom_call.1} parent=0 // pred_check_branch
    %17 = sbr.rel (0) target = $region17
  $region16: #{tpu_custom_call.1} parent=0 // pred_region
    _
  $region17: #{tpu_custom_call.1} parent=0 // pred_fallthru
    _
  // Predicated region
  $region18: #{tpu_custom_call.1} parent=0 // pred_check
    _
  $region19: #{tpu_custom_call.1} parent=0 // pred_check_branch
    %19 = sbr.rel (0) target = $region21
  $region20: #{tpu_custom_call.1} parent=0 // pred_region
    _
  $region21: #{tpu_custom_call.1} parent=0 // pred_fallthru
    _
  %v20 = vld [vmem:[%s0] sm:$0xff]
  %v21 = vld [vmem:[%s0 + $0x8] sm:$0xff]
  %v22 = vld [vmem:[%s0 + $0x10] sm:$0xff]
  %v23 = vld [vmem:[%s0 + $0x18] sm:$0xff]
  %v24 = vld [vmem:[%s0 + $0x20] sm:$0xff]
  %v25 = vld [vmem:[%s0 + $0x28] sm:$0xff]
  %v26 = vld [vmem:[%s0 + $0x30] sm:$0xff]
  %v27 = vld [vmem:[%s0 + $0x38] sm:$0xff]
  %v28 = vld [vmem:[%s1] sm:$0xff]
  %v29 = vld [vmem:[%s1 + $0x8] sm:$0xff]
  %v30 = vld [vmem:[%s1 + $0x10] sm:$0xff]
  %v31 = vld [vmem:[%s1 + $0x18] sm:$0xff]
  %v32 = vld [vmem:[%s1 + $0x20] sm:$0x7]
  %v33 = vld [vmem:[%s2] sm:$0x1]
  %vm34 = vcmask 23552
  %v35 = vsel %vm34, %v20, 0.0
  %v37 = vperm.slane %v33, 0
  %vm39 = vcmask 285696
  %v41 = vsel %vm39, %v35, 0
  %vm43 = vcmask 1042432
  %v45 = vsel %vm43, %v32, 0
  %47 = vmatpush.msra.mxu0 0.0
  %48 = vmatpush.msra.mxu0 0.0
  %49 = vmatpush.msra.mxu0 0.0
  %50 = vmatpush.msra.mxu0 0.0
  %51 = vmatpush.msra.mxu0 0.0
  %52 = vmatpush.msra.mxu0 0.0
  %53 = vmatpush.msra.mxu0 0.0
  %54 = vmatpush.msra.mxu0 0.0
  %55 = vmatpush.msra.mxu0 0.0
  %56 = vmatpush.msra.mxu0 0.0
  %57 = vmatpush.msra.mxu0 0.0
  %58 = vmatpush.msra.mxu0 %v45
  %59 = vmatpush.msra.mxu0 %v31
  %60 = vmatpush.msra.mxu0 %v30
  %61 = vmatpush.msra.mxu0 %v29
  %62 = vmatpush.msra.mxu0 %v28
  %63 = vmatmul.f32.gmra.mxu0 %v41
  %v64 = vpop.f32.mrf.mxu0
  %v65 = vadd.f32 %v37, %v64
  %66 = vdwg.mxu0
  %v67 = vxor.u32 %v65, 2147483648
  %v68 = vmul.f32 %v67, 1.442695
  %v69 = vpow.pop %v68
  %v70 = vadd.f32 %v69, 1.0
  %v71 = vrcp.pop %v70
  %v72 = vmul.f32 %v70, %v71
  %v73 = vsub.f32 1.0, %v72
  %v74 = vmul.f32 %v71, %v73
  %v75 = vadd.f32 %v71, %v74
  %vm76 = vweird.f32 %v70
  %vm77 = vweird.f32 %v71
  %vm78 = vmor %vm76, %vm77
  %v79 = vsel %vm78, %v71, %v75
  %v80 = vand.u32 2147483647, %v70
  %vm81 = vcmp.eq.f32.partialorder %v80, 8.507059e+37
  %v82 = vand.u32 %v70, 2147483648
  %v83 = vor.u32 1.1754944e-38, %v82
  %v84 = vsel %vm81, %v83, %v79
  %v85 = vmul.f32 1.0, %v84
  %v86 = vtanh.pop %v65
  %v87 = vmul.f32 %v85, 0.0
  %89 = vrot.lane.b32.xlu0 %v86, 64
  %v90 = vpop.permute.xlu0 %89
  %v92 = vmul.f32 %v85, %v90
  %94 = vrot.lane.b32.xlu0 %v92, 32
  %v95 = vpop.permute.xlu0 %94
  %v97 = vadd.f32 %v87, %v95
  %v98 = vtanh.pop %v97
  %100 = vrot.lane.b32.xlu0 %v98, 64
  %v101 = vpop.permute.xlu0 %100
  %v103 = vmul.f32 %v85, %v101
  %105 = vrot.lane.b32.xlu0 %v103, 32
  %v106 = vpop.permute.xlu0 %105
  %vm108 = vcmask 261120
  %109 = vst.msk [vmem:[#allocation2] sm:$0xff] %vm108, %v106
  %110 = vrot.lane.b32.xlu0 %v103, 35
  %v111 = vpop.permute.xlu0 %110
  %v113 = vsel %vm34, %v21, %v111
  %v115 = vsel %vm39, %v113, 0
  %117 = vmatpush.msra.mxu0 0.0
  %118 = vmatpush.msra.mxu0 0.0
  %119 = vmatpush.msra.mxu0 0.0
  %120 = vmatpush.msra.mxu0 0.0
  %121 = vmatpush.msra.mxu0 0.0
  %122 = vmatpush.msra.mxu0 0.0
  %123 = vmatpush.msra.mxu0 0.0
  %124 = vmatpush.msra.mxu0 0.0
  %125 = vmatpush.msra.mxu0 0.0
  %126 = vmatpush.msra.mxu0 0.0
  %127 = vmatpush.msra.mxu0 0.0
  %128 = vmatpush.msra.mxu0 %v45
  %129 = vmatpush.msra.mxu0 %v31
  %130 = vmatpush.msra.mxu0 %v30
  %131 = vmatpush.msra.mxu0 %v29
  %132 = vmatpush.msra.mxu0 %v28
  %133 = vmatmul.f32.gmra.mxu0 %v115
  %v134 = vpop.f32.mrf.mxu0
  %v135 = vadd.f32 %v37, %v134
  %136 = vdwg.mxu0
  %v137 = vxor.u32 %v135, 2147483648
  %v138 = vmul.f32 %v137, 1.442695
  %v139 = vpow.pop %v138
  %v140 = vadd.f32 %v139, 1.0
  %v141 = vrcp.pop %v140
  %v142 = vmul.f32 %v140, %v141
  %v143 = vsub.f32 1.0, %v142
  %v144 = vmul.f32 %v141, %v143
  %v145 = vadd.f32 %v141, %v144
  %vm146 = vweird.f32 %v140
  %vm147 = vweird.f32 %v141
  %vm148 = vmor %vm146, %vm147
  %v149 = vsel %vm148, %v141, %v145
  %v150 = vand.u32 2147483647, %v140
  %vm151 = vcmp.eq.f32.partialorder %v150, 8.507059e+37
  %v152 = vand.u32 %v140, 2147483648
  %v153 = vor.u32 1.1754944e-38, %v152
  %v154 = vsel %vm151, %v153, %v149
  %v155 = vmul.f32 1.0, %v154
  %v156 = vtanh.pop %v135
  %v157 = vmul.f32 %v155, %v97
  %159 = vrot.lane.b32.xlu0 %v156, 64
  %v160 = vpop.permute.xlu0 %159
  %v162 = vmul.f32 %v155, %v160
  %164 = vrot.lane.b32.xlu0 %v162, 32
  %v165 = vpop.permute.xlu0 %164
  %v167 = vadd.f32 %v157, %v165
  %v168 = vtanh.pop %v167
  %170 = vrot.lane.b32.xlu0 %v168, 64
  %v171 = vpop.permute.xlu0 %170
  %v173 = vmul.f32 %v155, %v171
  %175 = vrot.lane.b32.xlu0 %v173, 32
  %v176 = vpop.permute.xlu0 %175
  %178 = vst.msk [vmem:[#allocation2 + $0x8] sm:$0xff] %vm108, %v176
  %179 = vrot.lane.b32.xlu0 %v173, 35
  %v180 = vpop.permute.xlu0 %179
  %v182 = vsel %vm34, %v22, %v180
  %v184 = vsel %vm39, %v182, 0
  %186 = vmatpush.msra.mxu0 0.0
  %187 = vmatpush.msra.mxu0 0.0
  %188 = vmatpush.msra.mxu0 0.0
  %189 = vmatpush.msra.mxu0 0.0
  %190 = vmatpush.msra.mxu0 0.0
  %191 = vmatpush.msra.mxu0 0.0
  %192 = vmatpush.msra.mxu0 0.0
  %193 = vmatpush.msra.mxu0 0.0
  %194 = vmatpush.msra.mxu0 0.0
  %195 = vmatpush.msra.mxu0 0.0
  %196 = vmatpush.msra.mxu0 0.0
  %197 = vmatpush.msra.mxu0 %v45
  %198 = vmatpush.msra.mxu0 %v31
  %199 = vmatpush.msra.mxu0 %v30
  %200 = vmatpush.msra.mxu0 %v29
  %201 = vmatpush.msra.mxu0 %v28
  %202 = vmatmul.f32.gmra.mxu0 %v184
  %v203 = vpop.f32.mrf.mxu0
  %v204 = vadd.f32 %v37, %v203
  %205 = vdwg.mxu0
  %v206 = vxor.u32 %v204, 2147483648
  %v207 = vmul.f32 %v206, 1.442695
  %v208 = vpow.pop %v207
  %v209 = vadd.f32 %v208, 1.0
  %v210 = vrcp.pop %v209
  %v211 = vmul.f32 %v209, %v210
  %v212 = vsub.f32 1.0, %v211
  %v213 = vmul.f32 %v210, %v212
  %v214 = vadd.f32 %v210, %v213
  %vm215 = vweird.f32 %v209
  %vm216 = vweird.f32 %v210
  %vm217 = vmor %vm215, %vm216
  %v218 = vsel %vm217, %v210, %v214
  %v219 = vand.u32 2147483647, %v209
  %vm220 = vcmp.eq.f32.partialorder %v219, 8.507059e+37
  %v221 = vand.u32 %v209, 2147483648
  %v222 = vor.u32 1.1754944e-38, %v221
  %v223 = vsel %vm220, %v222, %v218
  %v224 = vmul.f32 1.0, %v223
  %v225 = vtanh.pop %v204
  %v226 = vmul.f32 %v224, %v167
  %228 = vrot.lane.b32.xlu0 %v225, 64
  %v229 = vpop.permute.xlu0 %228
  %v231 = vmul.f32 %v224, %v229
  %233 = vrot.lane.b32.xlu0 %v231, 32
  %v234 = vpop.permute.xlu0 %233
  %v236 = vadd.f32 %v226, %v234
  %v237 = vtanh.pop %v236
  %239 = vrot.lane.b32.xlu0 %v237, 64
  %v240 = vpop.permute.xlu0 %239
  %v242 = vmul.f32 %v224, %v240
  %244 = vrot.lane.b32.xlu0 %v242, 32
  %v245 = vpop.permute.xlu0 %244
  %247 = vst.msk [vmem:[#allocation2 + $0x10] sm:$0xff] %vm108, %v245
  %248 = vrot.lane.b32.xlu0 %v242, 35
  %v249 = vpop.permute.xlu0 %248
  %v251 = vsel %vm34, %v23, %v249
  %v253 = vsel %vm39, %v251, 0
  %255 = vmatpush.msra.mxu0 0.0
  %256 = vmatpush.msra.mxu0 0.0
  %257 = vmatpush.msra.mxu0 0.0
  %258 = vmatpush.msra.mxu0 0.0
  %259 = vmatpush.msra.mxu0 0.0
  %260 = vmatpush.msra.mxu0 0.0
  %261 = vmatpush.msra.mxu0 0.0
  %262 = vmatpush.msra.mxu0 0.0
  %263 = vmatpush.msra.mxu0 0.0
  %264 = vmatpush.msra.mxu0 0.0
  %265 = vmatpush.msra.mxu0 0.0
  %266 = vmatpush.msra.mxu0 %v45
  %267 = vmatpush.msra.mxu0 %v31
  %268 = vmatpush.msra.mxu0 %v30
  %269 = vmatpush.msra.mxu0 %v29
  %270 = vmatpush.msra.mxu0 %v28
  %271 = vmatmul.f32.gmra.mxu0 %v253
  %v272 = vpop.f32.mrf.mxu0
  %v273 = vadd.f32 %v37, %v272
  %274 = vdwg.mxu0
  %v275 = vxor.u32 %v273, 2147483648
  %v276 = vmul.f32 %v275, 1.442695
  %v277 = vpow.pop %v276
  %v278 = vadd.f32 %v277, 1.0
  %v279 = vrcp.pop %v278
  %v280 = vmul.f32 %v278, %v279
  %v281 = vsub.f32 1.0, %v280
  %v282 = vmul.f32 %v279, %v281
  %v283 = vadd.f32 %v279, %v282
  %vm284 = vweird.f32 %v278
  %vm285 = vweird.f32 %v279
  %vm286 = vmor %vm284, %vm285
  %v287 = vsel %vm286, %v279, %v283
  %v288 = vand.u32 2147483647, %v278
  %vm289 = vcmp.eq.f32.partialorder %v288, 8.507059e+37
  %v290 = vand.u32 %v278, 2147483648
  %v291 = vor.u32 1.1754944e-38, %v290
  %v292 = vsel %vm289, %v291, %v287
  %v293 = vmul.f32 1.0, %v292
  %v294 = vtanh.pop %v273
  %v295 = vmul.f32 %v293, %v236
  %297 = vrot.lane.b32.xlu0 %v294, 64
  %v298 = vpop.permute.xlu0 %297
  %v300 = vmul.f32 %v293, %v298
  %302 = vrot.lane.b32.xlu0 %v300, 32
  %v303 = vpop.permute.xlu0 %302
  %v305 = vadd.f32 %v295, %v303
  %v306 = vtanh.pop %v305
  %308 = vrot.lane.b32.xlu0 %v306, 64
  %v309 = vpop.permute.xlu0 %308
  %v311 = vmul.f32 %v293, %v309
  %313 = vrot.lane.b32.xlu0 %v311, 32
  %v314 = vpop.permute.xlu0 %313
  %316 = vst.msk [vmem:[#allocation2 + $0x18] sm:$0xff] %vm108, %v314
  %317 = vrot.lane.b32.xlu0 %v311, 35
  %v318 = vpop.permute.xlu0 %317
  %v320 = vsel %vm34, %v24, %v318
  %v322 = vsel %vm39, %v320, 0
  %324 = vmatpush.msra.mxu0 0.0
  %325 = vmatpush.msra.mxu0 0.0
  %326 = vmatpush.msra.mxu0 0.0
  %327 = vmatpush.msra.mxu0 0.0
  %328 = vmatpush.msra.mxu0 0.0
  %329 = vmatpush.msra.mxu0 0.0
  %330 = vmatpush.msra.mxu0 0.0
  %331 = vmatpush.msra.mxu0 0.0
  %332 = vmatpush.msra.mxu0 0.0
  %333 = vmatpush.msra.mxu0 0.0
  %334 = vmatpush.msra.mxu0 0.0
  %335 = vmatpush.msra.mxu0 %v45
  %336 = vmatpush.msra.mxu0 %v31
  %337 = vmatpush.msra.mxu0 %v30
  %338 = vmatpush.msra.mxu0 %v29
  %339 = vmatpush.msra.mxu0 %v28
  %340 = vmatmul.f32.gmra.mxu0 %v322
  %v341 = vpop.f32.mrf.mxu0
  %v342 = vadd.f32 %v37, %v341
  %343 = vdwg.mxu0
  %v344 = vxor.u32 %v342, 2147483648
  %v345 = vmul.f32 %v344, 1.442695
  %v346 = vpow.pop %v345
  %v347 = vadd.f32 %v346, 1.0
  %v348 = vrcp.pop %v347
  %v349 = vmul.f32 %v347, %v348
  %v350 = vsub.f32 1.0, %v349
  %v351 = vmul.f32 %v348, %v350
  %v352 = vadd.f32 %v348, %v351
  %vm353 = vweird.f32 %v347
  %vm354 = vweird.f32 %v348
  %vm355 = vmor %vm353, %vm354
  %v356 = vsel %vm355, %v348, %v352
  %v357 = vand.u32 2147483647, %v347
  %vm358 = vcmp.eq.f32.partialorder %v357, 8.507059e+37
  %v359 = vand.u32 %v347, 2147483648
  %v360 = vor.u32 1.1754944e-38, %v359
  %v361 = vsel %vm358, %v360, %v356
  %v362 = vmul.f32 1.0, %v361
  %v363 = vtanh.pop %v342
  %v364 = vmul.f32 %v362, %v305
  %366 = vrot.lane.b32.xlu0 %v363, 64
  %v367 = vpop.permute.xlu0 %366
  %v369 = vmul.f32 %v362, %v367
  %371 = vrot.lane.b32.xlu0 %v369, 32
  %v372 = vpop.permute.xlu0 %371
  %v374 = vadd.f32 %v364, %v372
  %v375 = vtanh.pop %v374
  %377 = vrot.lane.b32.xlu0 %v375, 64
  %v378 = vpop.permute.xlu0 %377
  %v380 = vmul.f32 %v362, %v378
  %382 = vrot.lane.b32.xlu0 %v380, 32
  %v383 = vpop.permute.xlu0 %382
  %385 = vst.msk [vmem:[#allocation2 + $0x20] sm:$0xff] %vm108, %v383
  %386 = vrot.lane.b32.xlu0 %v380, 35
  %v387 = vpop.permute.xlu0 %386
  %v389 = vsel %vm34, %v25, %v387
  %v391 = vsel %vm39, %v389, 0
  %393 = vmatpush.msra.mxu0 0.0
  %394 = vmatpush.msra.mxu0 0.0
  %395 = vmatpush.msra.mxu0 0.0
  %396 = vmatpush.msra.mxu0 0.0
  %397 = vmatpush.msra.mxu0 0.0
  %398 = vmatpush.msra.mxu0 0.0
  %399 = vmatpush.msra.mxu0 0.0
  %400 = vmatpush.msra.mxu0 0.0
  %401 = vmatpush.msra.mxu0 0.0
  %402 = vmatpush.msra.mxu0 0.0
  %403 = vmatpush.msra.mxu0 0.0
  %404 = vmatpush.msra.mxu0 %v45
  %405 = vmatpush.msra.mxu0 %v31
  %406 = vmatpush.msra.mxu0 %v30
  %407 = vmatpush.msra.mxu0 %v29
  %408 = vmatpush.msra.mxu0 %v28
  %409 = vmatmul.f32.gmra.mxu0 %v391
  %v410 = vpop.f32.mrf.mxu0
  %v411 = vadd.f32 %v37, %v410
  %412 = vdwg.mxu0
  %v413 = vxor.u32 %v411, 2147483648
  %v414 = vmul.f32 %v413, 1.442695
  %v415 = vpow.pop %v414
  %v416 = vadd.f32 %v415, 1.0
  %v417 = vrcp.pop %v416
  %v418 = vmul.f32 %v416, %v417
  %v419 = vsub.f32 1.0, %v418
  %v420 = vmul.f32 %v417, %v419
  %v421 = vadd.f32 %v417, %v420
  %vm422 = vweird.f32 %v416
  %vm423 = vweird.f32 %v417
  %vm424 = vmor %vm422, %vm423
  %v425 = vsel %vm424, %v417, %v421
  %v426 = vand.u32 2147483647, %v416
  %vm427 = vcmp.eq.f32.partialorder %v426, 8.507059e+37
  %v428 = vand.u32 %v416, 2147483648
  %v429 = vor.u32 1.1754944e-38, %v428
  %v430 = vsel %vm427, %v429, %v425
  %v431 = vmul.f32 1.0, %v430
  %v432 = vtanh.pop %v411
  %v433 = vmul.f32 %v431, %v374
  %435 = vrot.lane.b32.xlu0 %v432, 64
  %v436 = vpop.permute.xlu0 %435
  %v438 = vmul.f32 %v431, %v436
  %440 = vrot.lane.b32.xlu0 %v438, 32
  %v441 = vpop.permute.xlu0 %440
  %v443 = vadd.f32 %v433, %v441
  %v444 = vtanh.pop %v443
  %446 = vrot.lane.b32.xlu0 %v444, 64
  %v447 = vpop.permute.xlu0 %446
  %v449 = vmul.f32 %v431, %v447
  %451 = vrot.lane.b32.xlu0 %v449, 32
  %v452 = vpop.permute.xlu0 %451
  %454 = vst.msk [vmem:[#allocation2 + $0x28] sm:$0xff] %vm108, %v452
  %455 = vrot.lane.b32.xlu0 %v449, 35
  %v456 = vpop.permute.xlu0 %455
  %v458 = vsel %vm34, %v26, %v456
  %v460 = vsel %vm39, %v458, 0
  %462 = vmatpush.msra.mxu0 0.0
  %463 = vmatpush.msra.mxu0 0.0
  %464 = vmatpush.msra.mxu0 0.0
  %465 = vmatpush.msra.mxu0 0.0
  %466 = vmatpush.msra.mxu0 0.0
  %467 = vmatpush.msra.mxu0 0.0
  %468 = vmatpush.msra.mxu0 0.0
  %469 = vmatpush.msra.mxu0 0.0
  %470 = vmatpush.msra.mxu0 0.0
  %471 = vmatpush.msra.mxu0 0.0
  %472 = vmatpush.msra.mxu0 0.0
  %473 = vmatpush.msra.mxu0 %v45
  %474 = vmatpush.msra.mxu0 %v31
  %475 = vmatpush.msra.mxu0 %v30
  %476 = vmatpush.msra.mxu0 %v29
  %477 = vmatpush.msra.mxu0 %v28
  %478 = vmatmul.f32.gmra.mxu0 %v460
  %v479 = vpop.f32.mrf.mxu0
  %v480 = vadd.f32 %v37, %v479
  %481 = vdwg.mxu0
  %v482 = vxor.u32 %v480, 2147483648
  %v483 = vmul.f32 %v482, 1.442695
  %v484 = vpow.pop %v483
  %v485 = vadd.f32 %v484, 1.0
  %v486 = vrcp.pop %v485
  %v487 = vmul.f32 %v485, %v486
  %v488 = vsub.f32 1.0, %v487
  %v489 = vmul.f32 %v486, %v488
  %v490 = vadd.f32 %v486, %v489
  %vm491 = vweird.f32 %v485
  %vm492 = vweird.f32 %v486
  %vm493 = vmor %vm491, %vm492
  %v494 = vsel %vm493, %v486, %v490
  %v495 = vand.u32 2147483647, %v485
  %vm496 = vcmp.eq.f32.partialorder %v495, 8.507059e+37
  %v497 = vand.u32 %v485, 2147483648
  %v498 = vor.u32 1.1754944e-38, %v497
  %v499 = vsel %vm496, %v498, %v494
  %v500 = vmul.f32 1.0, %v499
  %v501 = vtanh.pop %v480
  %v502 = vmul.f32 %v500, %v443
  %504 = vrot.lane.b32.xlu0 %v501, 64
  %v505 = vpop.permute.xlu0 %504
  %v507 = vmul.f32 %v500, %v505
  %509 = vrot.lane.b32.xlu0 %v507, 32
  %v510 = vpop.permute.xlu0 %509
  %v512 = vadd.f32 %v502, %v510
  %v513 = vtanh.pop %v512
  %515 = vrot.lane.b32.xlu0 %v513, 64
  %v516 = vpop.permute.xlu0 %515
  %v518 = vmul.f32 %v500, %v516
  %520 = vrot.lane.b32.xlu0 %v518, 32
  %v521 = vpop.permute.xlu0 %520
  %523 = vst.msk [vmem:[#allocation2 + $0x30] sm:$0xff] %vm108, %v521
  %524 = vrot.lane.b32.xlu0 %v518, 35
  %v525 = vpop.permute.xlu0 %524
  %v527 = vsel %vm34, %v27, %v525
  %v529 = vsel %vm39, %v527, 0
  %531 = vmatpush.msra.mxu0 0.0
  %532 = vmatpush.msra.mxu0 0.0
  %533 = vmatpush.msra.mxu0 0.0
  %534 = vmatpush.msra.mxu0 0.0
  %535 = vmatpush.msra.mxu0 0.0
  %536 = vmatpush.msra.mxu0 0.0
  %537 = vmatpush.msra.mxu0 0.0
  %538 = vmatpush.msra.mxu0 0.0
  %539 = vmatpush.msra.mxu0 0.0
  %540 = vmatpush.msra.mxu0 0.0
  %541 = vmatpush.msra.mxu0 0.0
  %542 = vmatpush.msra.mxu0 %v45
  %543 = vmatpush.msra.mxu0 %v31
  %544 = vmatpush.msra.mxu0 %v30
  %545 = vmatpush.msra.mxu0 %v29
  %546 = vmatpush.msra.mxu0 %v28
  %547 = vmatmul.f32.gmra.mxu0 %v529
  %v548 = vpop.f32.mrf.mxu0
  %v549 = vadd.f32 %v37, %v548
  %550 = vdwg.mxu0
  %v551 = vxor.u32 %v549, 2147483648
  %v552 = vmul.f32 %v551, 1.442695
  %v553 = vpow.pop %v552
  %v554 = vadd.f32 %v553, 1.0
  %v555 = vrcp.pop %v554
  %v556 = vmul.f32 %v554, %v555
  %v557 = vsub.f32 1.0, %v556
  %v558 = vmul.f32 %v555, %v557
  %v559 = vadd.f32 %v555, %v558
  %vm560 = vweird.f32 %v554
  %vm561 = vweird.f32 %v555
  %vm562 = vmor %vm560, %vm561
  %v563 = vsel %vm562, %v555, %v559
  %v564 = vand.u32 2147483647, %v554
  %vm565 = vcmp.eq.f32.partialorder %v564, 8.507059e+37
  %v566 = vand.u32 %v554, 2147483648
  %v567 = vor.u32 1.1754944e-38, %v566
  %v568 = vsel %vm565, %v567, %v563
  %v569 = vmul.f32 1.0, %v568
  %v570 = vtanh.pop %v549
  %v571 = vmul.f32 %v569, %v512
  %573 = vrot.lane.b32.xlu0 %v570, 64
  %v574 = vpop.permute.xlu0 %573
  %v576 = vmul.f32 %v569, %v574
  %578 = vrot.lane.b32.xlu0 %v576, 32
  %v579 = vpop.permute.xlu0 %578
  %v581 = vadd.f32 %v571, %v579
  %v582 = vtanh.pop %v581
  %584 = vrot.lane.b32.xlu0 %v582, 64
  %v585 = vpop.permute.xlu0 %584
  %v587 = vmul.f32 %v569, %v585
  %589 = vrot.lane.b32.xlu0 %v587, 32
  %v590 = vpop.permute.xlu0 %589
  %592 = vst.msk [vmem:[#allocation2 + $0x38] sm:$0xff] %vm108, %v590
  %v593 = vld [vmem:[#allocation2] sm:$0xff]
  %v594 = vld [vmem:[#allocation2 + $0x8] sm:$0xff]
  %v595 = vld [vmem:[#allocation2 + $0x10] sm:$0xff]
  %v596 = vld [vmem:[#allocation2 + $0x18] sm:$0xff]
  %v597 = vld [vmem:[#allocation2 + $0x20] sm:$0xff]
  %v598 = vld [vmem:[#allocation2 + $0x28] sm:$0xff]
  %v599 = vld [vmem:[#allocation2 + $0x30] sm:$0xff]
  %v600 = vld [vmem:[#allocation2 + $0x38] sm:$0xff]
  %v601 = vld [vmem:[%s3] sm:$0xff]
  %v602 = vld [vmem:[%s3 + $0x8] sm:$0xff]
  %v603 = vld [vmem:[%s3 + $0x10] sm:$0xff]
  %v604 = vld [vmem:[%s3 + $0x18] sm:$0xff]
  %v605 = vld [vmem:[%s4] sm:$0x1]
  %v607 = vperm.slane %v605, 0
  %v610 = vsel %vm108, %v593, 0
  %v613 = vsel %vm108, %v594, 0
  %v616 = vsel %vm108, %v595, 0
  %v619 = vsel %vm108, %v596, 0
  %v622 = vsel %vm108, %v597, 0
  %v625 = vsel %vm108, %v598, 0
  %v628 = vsel %vm108, %v599, 0
  %v631 = vsel %vm108, %v600, 0
  %633 = vmatpush.msra.mxu0 0.0
  %634 = vmatpush.msra.mxu0 0.0
  %635 = vmatpush.msra.mxu0 0.0
  %636 = vmatpush.msra.mxu0 0.0
  %637 = vmatpush.msra.mxu0 0.0
  %638 = vmatpush.msra.mxu0 0.0
  %639 = vmatpush.msra.mxu0 0.0
  %640 = vmatpush.msra.mxu0 0.0
  %641 = vmatpush.msra.mxu0 0.0
  %642 = vmatpush.msra.mxu0 0.0
  %643 = vmatpush.msra.mxu0 0.0
  %644 = vmatpush.msra.mxu0 0.0
  %645 = vmatpush.msra.mxu0 %v604
  %646 = vmatpush.msra.mxu0 %v603
  %647 = vmatpush.msra.mxu0 %v602
  %648 = vmatpush.msra.mxu0 %v601
  %649 = vmatmul.f32.gmra.mxu0 %v610
  %v650 = vpop.f32.mrf.mxu0
  %v651 = vadd.f32 %v607, %v650
  %652 = vmatmul.f32.gmra.mxu0 %v613
  %v653 = vpop.f32.mrf.mxu0
  %v654 = vadd.f32 %v607, %v653
  %655 = vmatmul.f32.gmra.mxu0 %v616
  %v656 = vpop.f32.mrf.mxu0
  %v657 = vadd.f32 %v607, %v656
  %658 = vmatmul.f32.gmra.mxu0 %v619
  %v659 = vpop.f32.mrf.mxu0
  %v660 = vadd.f32 %v607, %v659
  %661 = vmatmul.f32.gmra.mxu0 %v622
  %v662 = vpop.f32.mrf.mxu0
  %v663 = vadd.f32 %v607, %v662
  %664 = vmatmul.f32.gmra.mxu0 %v625
  %v665 = vpop.f32.mrf.mxu0
  %v666 = vadd.f32 %v607, %v665
  %667 = vmatmul.f32.gmra.mxu0 %v628
  %v668 = vpop.f32.mrf.mxu0
  %v669 = vadd.f32 %v607, %v668
  %670 = vmatmul.f32.gmra.mxu0 %v631
  %v671 = vpop.f32.mrf.mxu0
  %v672 = vadd.f32 %v607, %v671
  %673 = vdwg.mxu0
  %674 = vst.msk [vmem:[%s5] sm:$0xff] %vm34, %v651
  %675 = vst.msk [vmem:[%s5 + $0x8] sm:$0xff] %vm34, %v654
  %676 = vst.msk [vmem:[%s5 + $0x10] sm:$0xff] %vm34, %v657
  %677 = vst.msk [vmem:[%s5 + $0x18] sm:$0xff] %vm34, %v660
  %678 = vst.msk [vmem:[%s5 + $0x20] sm:$0xff] %vm34, %v663
  %679 = vst.msk [vmem:[%s5 + $0x28] sm:$0xff] %vm34, %v666
  %680 = vst.msk [vmem:[%s5 + $0x30] sm:$0xff] %vm34, %v669
  %681 = vst.msk [vmem:[%s5 + $0x38] sm:$0xff] %vm34, %v672
  // Predicated region
  $region22: #{tpu_custom_call.1} parent=0 // pred_check
    _
  $region23: #{tpu_custom_call.1} parent=0 // pred_check_branch
    %683 = sbr.rel (0) target = $region25
  $region24: #{tpu_custom_call.1} parent=0 // pred_region
    _
  $region25: #{tpu_custom_call.1} parent=0 // pred_fallthru
    _
  // Predicated region
  $region26: #{tpu_custom_call.1} parent=0 // pred_check
    _
  $region27: #{tpu_custom_call.1} parent=0 // pred_check_branch
    %685 = sbr.rel (0) target = $region29
  $region28: #{tpu_custom_call.1} parent=0 // pred_region
    _
  $region29: #{tpu_custom_call.1} parent=0 // pred_fallthru
    _

</llo_original>
